<compile_context>
chip_gen: v6e
topology: v6e:2x2x1
jax: 0.10.0
libtpu: 0.0.40
codegen_flags: <defaults>
</compile_context>

<pallas_src>
import jax
import jax.numpy as jnp
from jax.experimental import pallas as pl
from jax.experimental.pallas import tpu as pltpu

K_IN = 784
K_PAD = 896      # 784 rounded up to a multiple of 128
N_OUT = 10
OUT_PAD = 128    # lane-dense output width


def _round_up(n, m):
    return ((n + m - 1) // m) * m


def mlp_kernel(x_ref, w1_ref, b1_ref, w2_ref, b2_ref, w3_ref, b3_ref, o_ref):
    # fc1 + ReLU (dropout1 = identity at inference)
    h1 = jnp.dot(x_ref[...], w1_ref[...], preferred_element_type=jnp.float32)
    h1 = jnp.maximum(h1 + b1_ref[...], 0.0)

    # fc2 (dropout2 = identity at inference)
    h2 = jnp.dot(h1.astype(w2_ref.dtype), w2_ref[...],
                 preferred_element_type=jnp.float32)
    h2 = h2 + b2_ref[...]

    # fc3 + sigmoid (output is lane-padded to 128; wrapper slices [:, :10])
    h3 = jnp.dot(h2.astype(w3_ref.dtype), w3_ref[...],
                 preferred_element_type=jnp.float32)
    h3 = h3 + b3_ref[...]
    o_ref[...] = jax.nn.sigmoid(h3)


def image_classifier_forward(x, params, *, tm=512):
    """x: (B, 784) float32. params: dict w1,b1,w2,b2,w3,b3 (layout (in, out))."""
    B = x.shape[0]

    # One-time host-side padding / casts (layout plumbing, not compute):
    # pad K 784 -> 896 with zeros (does not change the matmul result),
    # cast x / weights to bf16, keep biases f32.
    x_p = jnp.pad(x, ((0, 0), (0, K_PAD - K_IN))).astype(jnp.bfloat16)
    w1 = jnp.pad(params["w1"], ((0, K_PAD - K_IN), (0, 0))).astype(jnp.bfloat16)
    b1 = params["b1"].astype(jnp.float32)
    w2 = params["w2"].astype(jnp.bfloat16)
    b2 = params["b2"].astype(jnp.float32)
    w3 = jnp.pad(params["w3"], ((0, 0), (0, OUT_PAD - N_OUT))).astype(jnp.bfloat16)
    b3 = jnp.pad(params["b3"], ((0, 0), (0, OUT_PAD - N_OUT))).astype(jnp.float32)

    # Batch tiling: TM rows per grid step (sweepable; 512 keeps the per-step
    # x tile ~0.9 MB bf16, well inside every chip's scoped VMEM budget while
    # amortizing the ~0.35 us/step grid overhead).
    tm = min(tm, _round_up(B, 8))
    b_pad = _round_up(B, tm)
    if b_pad != B:
        x_p = jnp.pad(x_p, ((0, b_pad - B), (0, 0)))
    grid = (b_pad // tm,)

    def const_spec(shape):
        # Full-shape block, constant index_map -> stays VMEM-resident.
        return pl.BlockSpec(shape, lambda i: (0, 0))

    out = pl.pallas_call(
        mlp_kernel,
        out_shape=jax.ShapeDtypeStruct((b_pad, OUT_PAD), jnp.float32),
        grid=grid,
        in_specs=[
            pl.BlockSpec((tm, K_PAD), lambda i: (i, 0)),   # x: batch-tiled
            const_spec(w1.shape), const_spec(b1.shape),
            const_spec(w2.shape), const_spec(b2.shape),
            const_spec(w3.shape), const_spec(b3.shape),
        ],
        out_specs=pl.BlockSpec((tm, OUT_PAD), lambda i: (i, 0)),
        compiler_params=pltpu.CompilerParams(
            dimension_semantics=("parallel",),
        ),
        cost_estimate=pl.CostEstimate(
            flops=2 * b_pad * (K_PAD * 64 + 64 * 32 + 32 * OUT_PAD),
            transcendentals=b_pad * OUT_PAD,
            bytes_accessed=b_pad * (K_PAD * 2 + OUT_PAD * 4)
            + 2 * (K_PAD * 64 + 64 * 32 + 32 * OUT_PAD),
        ),
    )(x_p, w1, b1, w2, b2, w3, b3)

    return out[:B, :N_OUT]


def init_params(key):
    """Deterministic init mimicking nn.Linear default (uniform +/- 1/sqrt(fan_in))."""
    def linear(k, fan_in, fan_out):
        kw, kb = jax.random.split(k)
        bound = 1.0 / jnp.sqrt(fan_in)
        w = jax.random.uniform(kw, (fan_in, fan_out), jnp.float32, -bound, bound)
        b = jax.random.uniform(kb, (1, fan_out), jnp.float32, -bound, bound)
        return w, b

    k1, k2, k3 = jax.random.split(key, 3)
    w1, b1 = linear(k1, 784, 64)
    w2, b2 = linear(k2, 64, 32)
    w3, b3 = linear(k3, 32, 10)
    return {"w1": w1, "b1": b1, "w2": w2, "b2": b2, "w3": w3, "b3": b3}


def reference_forward(x, p):
    h1 = jnp.maximum(x @ p["w1"] + p["b1"], 0.0)
    h2 = h1 @ p["w2"] + p["b2"]
    h3 = h2 @ p["w3"] + p["b3"]
    return jax.nn.sigmoid(h3)


if __name__ == "__main__":
    key = jax.random.PRNGKey(0)
    kx, kp = jax.random.split(key)

    B = 8
    x = jax.random.normal(kx, (B, 784), dtype=jnp.float32)
    params = init_params(kp)

    out = image_classifier_forward(x, params)
    out = jax.block_until_ready(out)

    ref = reference_forward(x, params)
    assert out.shape == (B, 10)
    # bf16 inputs/weights with f32 accumulation -> loosen tolerance vs f32 ref.
    assert jnp.allclose(out, ref, atol=2e-2, rtol=2e-2), "mismatch vs reference"

    print("KERNEL_OK")
</pallas_src>

<mosaic_0001>
module attributes {stable_mosaic.version = 11 : i64} {
  func.func @mlp_kernel(%arg0: i32, %arg1: memref<8x896xbf16, #tpu.memory_space<vmem>>, %arg2: memref<896x64xbf16, #tpu.memory_space<vmem>>, %arg3: memref<1x64xf32, #tpu.memory_space<vmem>>, %arg4: memref<64x32xbf16, #tpu.memory_space<vmem>>, %arg5: memref<1x32xf32, #tpu.memory_space<vmem>>, %arg6: memref<32x128xbf16, #tpu.memory_space<vmem>>, %arg7: memref<1x128xf32, #tpu.memory_space<vmem>>, %arg8: memref<8x128xf32, #tpu.memory_space<vmem>>) attributes {dimension_semantics = [#tpu.dimension_semantics<parallel>], iteration_bounds = array<i64: 1>, scalar_prefetch = 0 : i64, scratch_operands = 0 : i64, tpu.core_type = #tpu.core_type<tc>, window_params = [{transform_indices = @transform_0, window_bounds = array<i64: 8, 896>}, {pipeline_mode = #tpu.pipeline_mode<synchronous>, transform_indices = @transform_1, window_bounds = array<i64: 896, 64>}, {pipeline_mode = #tpu.pipeline_mode<synchronous>, transform_indices = @transform_2, window_bounds = array<i64: 1, 64>}, {pipeline_mode = #tpu.pipeline_mode<synchronous>, transform_indices = @transform_3, window_bounds = array<i64: 64, 32>}, {pipeline_mode = #tpu.pipeline_mode<synchronous>, transform_indices = @transform_4, window_bounds = array<i64: 1, 32>}, {pipeline_mode = #tpu.pipeline_mode<synchronous>, transform_indices = @transform_5, window_bounds = array<i64: 32, 128>}, {pipeline_mode = #tpu.pipeline_mode<synchronous>, transform_indices = @transform_6, window_bounds = array<i64: 1, 128>}, {transform_indices = @transform_7, window_bounds = array<i64: 8, 128>}]} {
    %c0 = arith.constant 0 : index
    %c0_0 = arith.constant 0 : index
    %0 = vector.load %arg1[%c0, %c0_0] : memref<8x896xbf16, #tpu.memory_space<vmem>>, vector<8x896xbf16>
    %c0_1 = arith.constant 0 : index
    %c0_2 = arith.constant 0 : index
    %1 = vector.load %arg2[%c0_1, %c0_2] : memref<896x64xbf16, #tpu.memory_space<vmem>>, vector<896x64xbf16>
    %cst = arith.constant dense<0.000000e+00> : vector<8x64xf32>
    %2 = tpu.matmul %0, %1, %cst {dimension_numbers = #tpu.dot_dimension_numbers<[1], [0], [0], [1], [0, 0, 1, 1], [], []>} : vector<8x896xbf16>, vector<896x64xbf16>, vector<8x64xf32> -> vector<8x64xf32>
    %c0_3 = arith.constant 0 : index
    %c0_4 = arith.constant 0 : index
    %3 = vector.load %arg3[%c0_3, %c0_4] : memref<1x64xf32, #tpu.memory_space<vmem>>, vector<1x64xf32>
    %4 = vector.broadcast %3 : vector<1x64xf32> to vector<8x64xf32>
    %5 = arith.addf %2, %4 : vector<8x64xf32>
    %cst_5 = arith.constant 0.000000e+00 : f32
    %6 = vector.broadcast %cst_5 : f32 to vector<8x64xf32>
    %7 = arith.maximumf %5, %6 : vector<8x64xf32>
    %8 = arith.truncf %7 : vector<8x64xf32> to vector<8x64xbf16>
    %c0_6 = arith.constant 0 : index
    %c0_7 = arith.constant 0 : index
    %9 = vector.load %arg4[%c0_6, %c0_7] : memref<64x32xbf16, #tpu.memory_space<vmem>>, vector<64x32xbf16>
    %cst_8 = arith.constant dense<0.000000e+00> : vector<8x32xf32>
    %10 = tpu.matmul %8, %9, %cst_8 {dimension_numbers = #tpu.dot_dimension_numbers<[1], [0], [0], [1], [0, 0, 1, 1], [], []>} : vector<8x64xbf16>, vector<64x32xbf16>, vector<8x32xf32> -> vector<8x32xf32>
    %c0_9 = arith.constant 0 : index
    %c0_10 = arith.constant 0 : index
    %11 = vector.load %arg5[%c0_9, %c0_10] : memref<1x32xf32, #tpu.memory_space<vmem>>, vector<1x32xf32>
    %12 = vector.broadcast %11 : vector<1x32xf32> to vector<8x32xf32>
    %13 = arith.addf %10, %12 : vector<8x32xf32>
    %14 = arith.truncf %13 : vector<8x32xf32> to vector<8x32xbf16>
    %c0_11 = arith.constant 0 : index
    %c0_12 = arith.constant 0 : index
    %15 = vector.load %arg6[%c0_11, %c0_12] : memref<32x128xbf16, #tpu.memory_space<vmem>>, vector<32x128xbf16>
    %cst_13 = arith.constant dense<0.000000e+00> : vector<8x128xf32>
    %16 = tpu.matmul %14, %15, %cst_13 {dimension_numbers = #tpu.dot_dimension_numbers<[1], [0], [0], [1], [0, 0, 1, 1], [], []>} : vector<8x32xbf16>, vector<32x128xbf16>, vector<8x128xf32> -> vector<8x128xf32>
    %c0_14 = arith.constant 0 : index
    %c0_15 = arith.constant 0 : index
    %17 = vector.load %arg7[%c0_14, %c0_15] : memref<1x128xf32, #tpu.memory_space<vmem>>, vector<1x128xf32>
    %18 = vector.broadcast %17 : vector<1x128xf32> to vector<8x128xf32>
    %19 = arith.addf %16, %18 : vector<8x128xf32>
    %20 = arith.negf %19 : vector<8x128xf32>
    %21 = math.exp %20 : vector<8x128xf32>
    %cst_16 = arith.constant 1.000000e+00 : f32
    %22 = vector.broadcast %cst_16 : f32 to vector<8x128xf32>
    %23 = arith.addf %22, %21 : vector<8x128xf32>
    %24 = arith.divf %22, %23 : vector<8x128xf32>
    %c0_17 = arith.constant 0 : index
    %c0_18 = arith.constant 0 : index
    %25 = vector.load %arg8[%c0_17, %c0_18] : memref<8x128xf32, #tpu.memory_space<vmem>>, vector<8x128xf32>
    tpu.vector_store %arg8[%c0_17, %c0_18], %24 {strides = array<i32>} : memref<8x128xf32, #tpu.memory_space<vmem>>, vector<8x128xf32>,
    return
  }
  func.func @transform_0(%arg0: i32) -> (i32, i32) {
    %c0_i32 = arith.constant 0 : i32
    %c0_i32_0 = arith.constant 0 : i32
    return %arg0, %c0_i32 : i32, i32
  }
  func.func @transform_1(%arg0: i32) -> (i32, i32) {
    %c0_i32 = arith.constant 0 : i32
    %c0_i32_0 = arith.constant 0 : i32
    %c0_i32_1 = arith.constant 0 : i32
    return %c0_i32, %c0_i32_0 : i32, i32
  }
  func.func @transform_2(%arg0: i32) -> (i32, i32) {
    %c0_i32 = arith.constant 0 : i32
    %c0_i32_0 = arith.constant 0 : i32
    %c0_i32_1 = arith.constant 0 : i32
    return %c0_i32, %c0_i32_0 : i32, i32
  }
  func.func @transform_3(%arg0: i32) -> (i32, i32) {
    %c0_i32 = arith.constant 0 : i32
    %c0_i32_0 = arith.constant 0 : i32
    %c0_i32_1 = arith.constant 0 : i32
    return %c0_i32, %c0_i32_0 : i32, i32
  }
  func.func @transform_4(%arg0: i32) -> (i32, i32) {
    %c0_i32 = arith.constant 0 : i32
    %c0_i32_0 = arith.constant 0 : i32
    %c0_i32_1 = arith.constant 0 : i32
    return %c0_i32, %c0_i32_0 : i32, i32
  }
  func.func @transform_5(%arg0: i32) -> (i32, i32) {
    %c0_i32 = arith.constant 0 : i32
    %c0_i32_0 = arith.constant 0 : i32
    %c0_i32_1 = arith.constant 0 : i32
    return %c0_i32, %c0_i32_0 : i32, i32
  }
  func.func @transform_6(%arg0: i32) -> (i32, i32) {
    %c0_i32 = arith.constant 0 : i32
    %c0_i32_0 = arith.constant 0 : i32
    %c0_i32_1 = arith.constant 0 : i32
    return %c0_i32, %c0_i32_0 : i32, i32
  }
  func.func @transform_7(%arg0: i32) -> (i32, i32) {
    %c0_i32 = arith.constant 0 : i32
    %c0_i32_0 = arith.constant 0 : i32
    return %arg0, %c0_i32 : i32, i32
  }
}

</mosaic_0001>

<llo_original>
// kernel: tpu_custom_call.1
$region0: #{tpu_custom_call.1}
  #allocation0 [shape = 'u32[]', space=smem, size = 0x4, offset = 0x4, fixed_abs, tag = 'smem constant byte address 0x4 - core index']
  #allocation1 [shape = 'u32[144,128]{1,0:T(1,128)}', space=vmem, size = 0x12000, scoped, tag = 'internal scratch']
  %s0 = inlined_call_operand.vmem [shape: bf16[8,896], index: 0, kind: input, shape index: {}]
  %s1 = inlined_call_operand.vmem [shape: bf16[896,64], index: 1, kind: input, shape index: {}]
  %s2 = inlined_call_operand.vmem [shape: f32[1,64], index: 2, kind: input, shape index: {}]
  %s3 = inlined_call_operand.vmem [shape: bf16[64,32], index: 3, kind: input, shape index: {}]
  %s4 = inlined_call_operand.vmem [shape: f32[1,32], index: 4, kind: input, shape index: {}]
  %s5 = inlined_call_operand.vmem [shape: bf16[32,128], index: 5, kind: input, shape index: {}]
  %s6 = inlined_call_operand.vmem [shape: f32[1,128], index: 6, kind: input, shape index: {}]
  %s7 = inlined_call_operand.hbm [shape: f32[8,128], index: 7, kind: output, shape index: {}]
  %s8 = sld [smem:[#allocation0]]
  $region38: #{tpu_custom_call.1} parent=0
    _
  %s10 = ssub.s32 1, %s8
  %s11 = scalar_select 0, %s10, %s8
  $region1: #{tpu_custom_call.1} parent=0
    #allocation2 [shape = 'u8[4096]{0}', space=vmem, size = 0x1000, scoped, tag = 'output window, operand 0, single buffered']
    #allocation3 [shape = 's32[1]{0}', space=sflag, size = 0x4, scoped, tag = 'scoped memory for tpu_custom_call.1']
    %12 = vsyncpa [#allocation3], 0
    // Predicated region
    $region2: #{tpu_custom_call.1} parent=1 // pred_check
      _
    $region3: #{tpu_custom_call.1} parent=1 // pred_check_branch
      %14 = sbr.rel (0) target = $region5
    $region4: #{tpu_custom_call.1} parent=1 // pred_region
      _
    $region5: #{tpu_custom_call.1} parent=1 // pred_fallthru
      _
    // Predicated region
    $region6: #{tpu_custom_call.1} parent=1 // pred_check
      _
    $region7: #{tpu_custom_call.1} parent=1 // pred_check_branch
      %16 = sbr.rel (0) target = $region9
    $region8: #{tpu_custom_call.1} parent=1 // pred_region
      _
    $region9: #{tpu_custom_call.1} parent=1 // pred_fallthru
      _
    // Predicated region
    $region10: #{tpu_custom_call.1} parent=1 // pred_check
      _
    $region11: #{tpu_custom_call.1} parent=1 // pred_check_branch
      %18 = sbr.rel (0) target = $region13
    $region12: #{tpu_custom_call.1} parent=1 // pred_region
      _
    $region13: #{tpu_custom_call.1} parent=1 // pred_fallthru
      _
    // Predicated region
    $region14: #{tpu_custom_call.1} parent=1 // pred_check
      _
    $region15: #{tpu_custom_call.1} parent=1 // pred_check_branch
      %20 = sbr.rel (0) target = $region17
    $region16: #{tpu_custom_call.1} parent=1 // pred_region
      _
    $region17: #{tpu_custom_call.1} parent=1 // pred_fallthru
      _
    // Predicated region
    $region18: #{tpu_custom_call.1} parent=1 // pred_check
      _
    $region19: #{tpu_custom_call.1} parent=1 // pred_check_branch
      %22 = sbr.rel (0) target = $region21
    $region20: #{tpu_custom_call.1} parent=1 // pred_region
      _
    $region21: #{tpu_custom_call.1} parent=1 // pred_fallthru
      _
    // Predicated region
    $region22: #{tpu_custom_call.1} parent=1 // pred_check
      _
    $region23: #{tpu_custom_call.1} parent=1 // pred_check_branch
      %24 = sbr.rel (0) target = $region25
    $region24: #{tpu_custom_call.1} parent=1 // pred_region
      _
    $region25: #{tpu_custom_call.1} parent=1 // pred_fallthru
      _
    // Predicated region
    $region26: #{tpu_custom_call.1} parent=1 // pred_check
      _
    $region27: #{tpu_custom_call.1} parent=1 // pred_check_branch
      %26 = sbr.rel (0) target = $region29
    $region28: #{tpu_custom_call.1} parent=1 // pred_region
      _
    $region29: #{tpu_custom_call.1} parent=1 // pred_fallthru
      _
    %v28 = vld [vmem:[%s0] sm:$0xff]
    %v29 = vld [vmem:[%s0 + $0x8] sm:$0xff]
    %v30 = vld [vmem:[%s0 + $0x10] sm:$0xff]
    %v31 = vld [vmem:[%s0 + $0x18] sm:$0xf]
    %v32 = vld [vmem:[%s1] sm:$0xf]
    %v33 = vld [vmem:[%s1 + $0x4] sm:$0xf]
    %v34 = vld [vmem:[%s1 + $0x8] sm:$0xf]
    %v35 = vld [vmem:[%s1 + $0xc] sm:$0xf]
    %v36 = vld [vmem:[%s1 + $0x10] sm:$0xf]
    %v37 = vld [vmem:[%s1 + $0x14] sm:$0xf]
    %v38 = vld [vmem:[%s1 + $0x18] sm:$0xf]
    %v39 = vld [vmem:[%s1 + $0x1c] sm:$0xf]
    %v40 = vld [vmem:[%s1 + $0x20] sm:$0xf]
    %v41 = vld [vmem:[%s1 + $0x24] sm:$0xf]
    %v42 = vld [vmem:[%s1 + $0x28] sm:$0xf]
    %v43 = vld [vmem:[%s1 + $0x2c] sm:$0xf]
    %v44 = vld [vmem:[%s1 + $0x30] sm:$0xf]
    %v45 = vld [vmem:[%s1 + $0x34] sm:$0xf]
    %v46 = vld [vmem:[%s1 + $0x38] sm:$0xf]
    %v47 = vld [vmem:[%s1 + $0x3c] sm:$0xf]
    %v48 = vld [vmem:[%s1 + $0x40] sm:$0xf]
    %v49 = vld [vmem:[%s1 + $0x44] sm:$0xf]
    %v50 = vld [vmem:[%s1 + $0x48] sm:$0xf]
    %v51 = vld [vmem:[%s1 + $0x4c] sm:$0xf]
    %v52 = vld [vmem:[%s1 + $0x50] sm:$0xf]
    %v53 = vld [vmem:[%s1 + $0x54] sm:$0xf]
    %v54 = vld [vmem:[%s1 + $0x58] sm:$0xf]
    %v55 = vld [vmem:[%s1 + $0x5c] sm:$0xf]
    %v56 = vld [vmem:[%s1 + $0x60] sm:$0xf]
    %v57 = vld [vmem:[%s1 + $0x64] sm:$0xf]
    %v58 = vld [vmem:[%s1 + $0x68] sm:$0xf]
    %v59 = vld [vmem:[%s1 + $0x6c] sm:$0xf]
    %v60 = vld [vmem:[%s1 + $0x70] sm:$0xf]
    %v61 = vld [vmem:[%s1 + $0x74] sm:$0xf]
    %v62 = vld [vmem:[%s1 + $0x78] sm:$0xf]
    %v63 = vld [vmem:[%s1 + $0x7c] sm:$0xf]
    %v64 = vld [vmem:[%s1 + $0x80] sm:$0xf]
    %v65 = vld [vmem:[%s1 + $0x84] sm:$0xf]
    %v66 = vld [vmem:[%s1 + $0x88] sm:$0xf]
    %v67 = vld [vmem:[%s1 + $0x8c] sm:$0xf]
    %v68 = vld [vmem:[%s1 + $0x90] sm:$0xf]
    %v69 = vld [vmem:[%s1 + $0x94] sm:$0xf]
    %v70 = vld [vmem:[%s1 + $0x98] sm:$0xf]
    %v71 = vld [vmem:[%s1 + $0x9c] sm:$0xf]
    %v72 = vld [vmem:[%s1 + $0xa0] sm:$0xf]
    %v73 = vld [vmem:[%s1 + $0xa4] sm:$0xf]
    %v74 = vld [vmem:[%s1 + $0xa8] sm:$0xf]
    %v75 = vld [vmem:[%s1 + $0xac] sm:$0xf]
    %v76 = vld [vmem:[%s1 + $0xb0] sm:$0xf]
    %v77 = vld [vmem:[%s1 + $0xb4] sm:$0xf]
    %v78 = vld [vmem:[%s1 + $0xb8] sm:$0xf]
    %v79 = vld [vmem:[%s1 + $0xbc] sm:$0xf]
    %v80 = vld [vmem:[%s1 + $0xc0] sm:$0xf]
    %v81 = vld [vmem:[%s1 + $0xc4] sm:$0xf]
    %v82 = vld [vmem:[%s1 + $0xc8] sm:$0xf]
    %v83 = vld [vmem:[%s1 + $0xcc] sm:$0xf]
    %v84 = vld [vmem:[%s1 + $0xd0] sm:$0xf]
    %v85 = vld [vmem:[%s1 + $0xd4] sm:$0xf]
    %v86 = vld [vmem:[%s1 + $0xd8] sm:$0xf]
    %v87 = vld [vmem:[%s1 + $0xdc] sm:$0xf]
    %v88 = vld [vmem:[%s1 + $0xe0] sm:$0xf]
    %v89 = vld [vmem:[%s1 + $0xe4] sm:$0xf]
    %v90 = vld [vmem:[%s1 + $0xe8] sm:$0xf]
    %v91 = vld [vmem:[%s1 + $0xec] sm:$0xf]
    %v92 = vld [vmem:[%s1 + $0xf0] sm:$0xf]
    %v93 = vld [vmem:[%s1 + $0xf4] sm:$0xf]
    %v94 = vld [vmem:[%s1 + $0xf8] sm:$0xf]
    %v95 = vld [vmem:[%s1 + $0xfc] sm:$0xf]
    %v96 = vld [vmem:[%s1 + $0x100] sm:$0xf]
    %v97 = vld [vmem:[%s1 + $0x104] sm:$0xf]
    %v98 = vld [vmem:[%s1 + $0x108] sm:$0xf]
    %v99 = vld [vmem:[%s1 + $0x10c] sm:$0xf]
    %v100 = vld [vmem:[%s1 + $0x110] sm:$0xf]
    %v101 = vld [vmem:[%s1 + $0x114] sm:$0xf]
    %v102 = vld [vmem:[%s1 + $0x118] sm:$0xf]
    %v103 = vld [vmem:[%s1 + $0x11c] sm:$0xf]
    %v104 = vld [vmem:[%s1 + $0x120] sm:$0xf]
    %v105 = vld [vmem:[%s1 + $0x124] sm:$0xf]
    %v106 = vld [vmem:[%s1 + $0x128] sm:$0xf]
    %v107 = vld [vmem:[%s1 + $0x12c] sm:$0xf]
    %v108 = vld [vmem:[%s1 + $0x130] sm:$0xf]
    %v109 = vld [vmem:[%s1 + $0x134] sm:$0xf]
    %v110 = vld [vmem:[%s1 + $0x138] sm:$0xf]
    %v111 = vld [vmem:[%s1 + $0x13c] sm:$0xf]
    %v112 = vld [vmem:[%s1 + $0x140] sm:$0xf]
    %v113 = vld [vmem:[%s1 + $0x144] sm:$0xf]
    %v114 = vld [vmem:[%s1 + $0x148] sm:$0xf]
    %v115 = vld [vmem:[%s1 + $0x14c] sm:$0xf]
    %v116 = vld [vmem:[%s1 + $0x150] sm:$0xf]
    %v117 = vld [vmem:[%s1 + $0x154] sm:$0xf]
    %v118 = vld [vmem:[%s1 + $0x158] sm:$0xf]
    %v119 = vld [vmem:[%s1 + $0x15c] sm:$0xf]
    %v120 = vld [vmem:[%s1 + $0x160] sm:$0xf]
    %v121 = vld [vmem:[%s1 + $0x164] sm:$0xf]
    %v122 = vld [vmem:[%s1 + $0x168] sm:$0xf]
    %v123 = vld [vmem:[%s1 + $0x16c] sm:$0xf]
    %v124 = vld [vmem:[%s1 + $0x170] sm:$0xf]
    %v125 = vld [vmem:[%s1 + $0x174] sm:$0xf]
    %v126 = vld [vmem:[%s1 + $0x178] sm:$0xf]
    %v127 = vld [vmem:[%s1 + $0x17c] sm:$0xf]
    %v128 = vld [vmem:[%s1 + $0x180] sm:$0xf]
    %v129 = vld [vmem:[%s1 + $0x184] sm:$0xf]
    %v130 = vld [vmem:[%s1 + $0x188] sm:$0xf]
    %v131 = vld [vmem:[%s1 + $0x18c] sm:$0xf]
    %v132 = vld [vmem:[%s1 + $0x190] sm:$0xf]
    %v133 = vld [vmem:[%s1 + $0x194] sm:$0xf]
    %v134 = vld [vmem:[%s1 + $0x198] sm:$0xf]
    %v135 = vld [vmem:[%s1 + $0x19c] sm:$0xf]
    %v136 = vld [vmem:[%s1 + $0x1a0] sm:$0xf]
    %v137 = vld [vmem:[%s1 + $0x1a4] sm:$0xf]
    %v138 = vld [vmem:[%s1 + $0x1a8] sm:$0xf]
    %v139 = vld [vmem:[%s1 + $0x1ac] sm:$0xf]
    %v140 = vld [vmem:[%s1 + $0x1b0] sm:$0xf]
    %v141 = vld [vmem:[%s1 + $0x1b4] sm:$0xf]
    %v142 = vld [vmem:[%s1 + $0x1b8] sm:$0xf]
    %v143 = vld [vmem:[%s1 + $0x1bc] sm:$0xf]
    %v144 = vld [vmem:[%s2] sm:$0x1]
    %v146 = vlaneseq
    %v147 = vshrl.u32 %v146, 7
    %v148 = vsub.s32 0, %v147
    %v149 = vrot.slane %v144, %v148
    %v155 = vunpack.c.l.b16 %v28
    %v156 = vunpack.c.h.b16 %v28
    %v157 = vunpack.c.l.b16 %v29
    %v158 = vunpack.c.h.b16 %v29
    %v159 = vunpack.c.l.b16 %v30
    %v160 = vunpack.c.h.b16 %v30
    %v161 = vunpack.c.l.b16 %v31
    %v162 = vpack.c.b16 %v155, %v155
    %v163 = vpack.c.b16 %v156, %v156
    %v164 = vpack.c.b16 %v157, %v157
    %v165 = vpack.c.b16 %v158, %v158
    %v166 = vpack.c.b16 %v159, %v159
    %v167 = vpack.c.b16 %v160, %v160
    %v168 = vpack.c.b16 %v161, %v161
    %v288 = vunpack.c.l.b16 %v32
    %v289 = vunpack.c.l.b16 %v33
    %v290 = vunpack.c.l.b16 %v34
    %v291 = vunpack.c.l.b16 %v35
    %v292 = vunpack.c.l.b16 %v36
    %v293 = vunpack.c.l.b16 %v37
    %v294 = vunpack.c.l.b16 %v38
    %v295 = vunpack.c.l.b16 %v39
    %v296 = vunpack.c.l.b16 %v40
    %v297 = vunpack.c.l.b16 %v41
    %v298 = vunpack.c.l.b16 %v42
    %v299 = vunpack.c.l.b16 %v43
    %v300 = vunpack.c.l.b16 %v44
    %v301 = vunpack.c.l.b16 %v45
    %v302 = vunpack.c.l.b16 %v46
    %v303 = vunpack.c.l.b16 %v47
    %v304 = vunpack.c.l.b16 %v48
    %v305 = vunpack.c.l.b16 %v49
    %v306 = vunpack.c.l.b16 %v50
    %v307 = vunpack.c.l.b16 %v51
    %v308 = vunpack.c.l.b16 %v52
    %v309 = vunpack.c.l.b16 %v53
    %v310 = vunpack.c.l.b16 %v54
    %v311 = vunpack.c.l.b16 %v55
    %v312 = vunpack.c.l.b16 %v56
    %v313 = vunpack.c.l.b16 %v57
    %v314 = vunpack.c.l.b16 %v58
    %v315 = vunpack.c.l.b16 %v59
    %v316 = vunpack.c.l.b16 %v60
    %v317 = vunpack.c.l.b16 %v61
    %v318 = vunpack.c.l.b16 %v62
    %v319 = vunpack.c.l.b16 %v63
    %v320 = vunpack.c.l.b16 %v64
    %v321 = vunpack.c.l.b16 %v65
    %v322 = vunpack.c.l.b16 %v66
    %v323 = vunpack.c.l.b16 %v67
    %v324 = vunpack.c.l.b16 %v68
    %v325 = vunpack.c.l.b16 %v69
    %v326 = vunpack.c.l.b16 %v70
    %v327 = vunpack.c.l.b16 %v71
    %v328 = vunpack.c.l.b16 %v72
    %v329 = vunpack.c.l.b16 %v73
    %v330 = vunpack.c.l.b16 %v74
    %v331 = vunpack.c.l.b16 %v75
    %v332 = vunpack.c.l.b16 %v76
    %v333 = vunpack.c.l.b16 %v77
    %v334 = vunpack.c.l.b16 %v78
    %v335 = vunpack.c.l.b16 %v79
    %v336 = vunpack.c.l.b16 %v80
    %v337 = vunpack.c.l.b16 %v81
    %v338 = vunpack.c.l.b16 %v82
    %v339 = vunpack.c.l.b16 %v83
    %v340 = vunpack.c.l.b16 %v84
    %v341 = vunpack.c.l.b16 %v85
    %v342 = vunpack.c.l.b16 %v86
    %v343 = vunpack.c.l.b16 %v87
    %v344 = vunpack.c.l.b16 %v88
    %v345 = vunpack.c.l.b16 %v89
    %v346 = vunpack.c.l.b16 %v90
    %v347 = vunpack.c.l.b16 %v91
    %v348 = vunpack.c.l.b16 %v92
    %v349 = vunpack.c.l.b16 %v93
    %v350 = vunpack.c.l.b16 %v94
    %v351 = vunpack.c.l.b16 %v95
    %v352 = vunpack.c.l.b16 %v96
    %v353 = vunpack.c.l.b16 %v97
    %v354 = vunpack.c.l.b16 %v98
    %v355 = vunpack.c.l.b16 %v99
    %v356 = vunpack.c.l.b16 %v100
    %v357 = vunpack.c.l.b16 %v101
    %v358 = vunpack.c.l.b16 %v102
    %v359 = vunpack.c.l.b16 %v103
    %v360 = vunpack.c.l.b16 %v104
    %v361 = vunpack.c.l.b16 %v105
    %v362 = vunpack.c.l.b16 %v106
    %v363 = vunpack.c.l.b16 %v107
    %v364 = vunpack.c.l.b16 %v108
    %v365 = vunpack.c.l.b16 %v109
    %v366 = vunpack.c.l.b16 %v110
    %v367 = vunpack.c.l.b16 %v111
    %v368 = vunpack.c.l.b16 %v112
    %v369 = vunpack.c.l.b16 %v113
    %v370 = vunpack.c.l.b16 %v114
    %v371 = vunpack.c.l.b16 %v115
    %v372 = vunpack.c.l.b16 %v116
    %v373 = vunpack.c.l.b16 %v117
    %v374 = vunpack.c.l.b16 %v118
    %v375 = vunpack.c.l.b16 %v119
    %v376 = vunpack.c.l.b16 %v120
    %v377 = vunpack.c.l.b16 %v121
    %v378 = vunpack.c.l.b16 %v122
    %v379 = vunpack.c.l.b16 %v123
    %v380 = vunpack.c.l.b16 %v124
    %v381 = vunpack.c.l.b16 %v125
    %v382 = vunpack.c.l.b16 %v126
    %v383 = vunpack.c.l.b16 %v127
    %v384 = vunpack.c.l.b16 %v128
    %v385 = vunpack.c.l.b16 %v129
    %v386 = vunpack.c.l.b16 %v130
    %v387 = vunpack.c.l.b16 %v131
    %v388 = vunpack.c.l.b16 %v132
    %v389 = vunpack.c.l.b16 %v133
    %v390 = vunpack.c.l.b16 %v134
    %v391 = vunpack.c.l.b16 %v135
    %v392 = vunpack.c.l.b16 %v136
    %v393 = vunpack.c.l.b16 %v137
    %v394 = vunpack.c.l.b16 %v138
    %v395 = vunpack.c.l.b16 %v139
    %v396 = vunpack.c.l.b16 %v140
    %v397 = vunpack.c.l.b16 %v141
    %v398 = vunpack.c.l.b16 %v142
    %v399 = vunpack.c.l.b16 %v143
    %v400 = vpack.c.b16 %v289, %v288
    %v401 = vpack.c.b16 %v291, %v290
    %v402 = vpack.c.b16 %v293, %v292
    %v403 = vpack.c.b16 %v295, %v294
    %v404 = vpack.c.b16 %v297, %v296
    %v405 = vpack.c.b16 %v299, %v298
    %v406 = vpack.c.b16 %v301, %v300
    %v407 = vpack.c.b16 %v303, %v302
    %v408 = vpack.c.b16 %v305, %v304
    %v409 = vpack.c.b16 %v307, %v306
    %v410 = vpack.c.b16 %v309, %v308
    %v411 = vpack.c.b16 %v311, %v310
    %v412 = vpack.c.b16 %v313, %v312
    %v413 = vpack.c.b16 %v315, %v314
    %v414 = vpack.c.b16 %v317, %v316
    %v415 = vpack.c.b16 %v319, %v318
    %v416 = vpack.c.b16 %v321, %v320
    %v417 = vpack.c.b16 %v323, %v322
    %v418 = vpack.c.b16 %v325, %v324
    %v419 = vpack.c.b16 %v327, %v326
    %v420 = vpack.c.b16 %v329, %v328
    %v421 = vpack.c.b16 %v331, %v330
    %v422 = vpack.c.b16 %v333, %v332
    %v423 = vpack.c.b16 %v335, %v334
    %v424 = vpack.c.b16 %v337, %v336
    %v425 = vpack.c.b16 %v339, %v338
    %v426 = vpack.c.b16 %v341, %v340
    %v427 = vpack.c.b16 %v343, %v342
    %v428 = vpack.c.b16 %v345, %v344
    %v429 = vpack.c.b16 %v347, %v346
    %v430 = vpack.c.b16 %v349, %v348
    %v431 = vpack.c.b16 %v351, %v350
    %v432 = vpack.c.b16 %v353, %v352
    %v433 = vpack.c.b16 %v355, %v354
    %v434 = vpack.c.b16 %v357, %v356
    %v435 = vpack.c.b16 %v359, %v358
    %v436 = vpack.c.b16 %v361, %v360
    %v437 = vpack.c.b16 %v363, %v362
    %v438 = vpack.c.b16 %v365, %v364
    %v439 = vpack.c.b16 %v367, %v366
    %v440 = vpack.c.b16 %v369, %v368
    %v441 = vpack.c.b16 %v371, %v370
    %v442 = vpack.c.b16 %v373, %v372
    %v443 = vpack.c.b16 %v375, %v374
    %v444 = vpack.c.b16 %v377, %v376
    %v445 = vpack.c.b16 %v379, %v378
    %v446 = vpack.c.b16 %v381, %v380
    %v447 = vpack.c.b16 %v383, %v382
    %v448 = vpack.c.b16 %v385, %v384
    %v449 = vpack.c.b16 %v387, %v386
    %v450 = vpack.c.b16 %v389, %v388
    %v451 = vpack.c.b16 %v391, %v390
    %v452 = vpack.c.b16 %v393, %v392
    %v453 = vpack.c.b16 %v395, %v394
    %v454 = vpack.c.b16 %v397, %v396
    %v455 = vpack.c.b16 %v399, %v398
    %512 = vmatprep.subr.bf16.mxu0 0
    %513 = vmatpush1.bf16.msra.mxu0 %v407
    %514 = vmatprep.subr.bf16.mxu0 0
    %515 = vmatpush1.bf16.msra.mxu0 %v406
    %516 = vmatprep.subr.bf16.mxu0 0
    %517 = vmatpush1.bf16.msra.mxu0 %v405
    %518 = vmatprep.subr.bf16.mxu0 0
    %519 = vmatpush1.bf16.msra.mxu0 %v404
    %520 = vmatprep.subr.bf16.mxu0 0
    %521 = vmatpush1.bf16.msra.mxu0 %v403
    %522 = vmatprep.subr.bf16.mxu0 0
    %523 = vmatpush1.bf16.msra.mxu0 %v402
    %524 = vmatprep.subr.bf16.mxu0 0
    %525 = vmatpush1.bf16.msra.mxu0 %v401
    %526 = vmatprep.subr.bf16.mxu0 0
    %527 = vmatpush1.bf16.msra.mxu0 %v400
    %528 = vmatprep.subr.bf16.mxu0 0
    %529 = vmatpush2.bf16.msra.mxu0 %v415
    %530 = vmatprep.subr.bf16.mxu0 0
    %531 = vmatpush2.bf16.msra.mxu0 %v414
    %532 = vmatprep.subr.bf16.mxu0 0
    %533 = vmatpush2.bf16.msra.mxu0 %v413
    %534 = vmatprep.subr.bf16.mxu0 0
    %535 = vmatpush2.bf16.msra.mxu0 %v412
    %536 = vmatprep.subr.bf16.mxu0 0
    %537 = vmatpush2.bf16.msra.mxu0 %v411
    %538 = vmatprep.subr.bf16.mxu0 0
    %539 = vmatpush2.bf16.msra.mxu0 %v410
    %540 = vmatprep.subr.bf16.mxu0 0
    %541 = vmatpush2.bf16.msra.mxu0 %v409
    %542 = vmatprep.subr.bf16.mxu0 0
    %543 = vmatpush2.bf16.msra.mxu0 %v408
    %544 = vmatprep.mubr.bf16.mxu0 %v163
    %545 = vmatmul.mubr.bf16.gmra.mxu0 %v162
    %v546 = vpop.f32.mrf.mxu0
    %v547 = vadd.f32 %v149, %v546
    %v548 = vpop.f32.mrf.mxu0
    %v549 = vpop.f32.mrf.mxu0
    %v550 = vpop.f32.mrf.mxu0
    %551 = vdwg.mxu0
    %552 = vmatprep.subr.bf16.mxu0 0
    %553 = vmatpush1.bf16.msra.mxu0 %v423
    %554 = vmatprep.subr.bf16.mxu0 0
    %555 = vmatpush1.bf16.msra.mxu0 %v422
    %556 = vmatprep.subr.bf16.mxu0 0
    %557 = vmatpush1.bf16.msra.mxu0 %v421
    %558 = vmatprep.subr.bf16.mxu0 0
    %559 = vmatpush1.bf16.msra.mxu0 %v420
    %560 = vmatprep.subr.bf16.mxu0 0
    %561 = vmatpush1.bf16.msra.mxu0 %v419
    %562 = vmatprep.subr.bf16.mxu0 0
    %563 = vmatpush1.bf16.msra.mxu0 %v418
    %564 = vmatprep.subr.bf16.mxu0 0
    %565 = vmatpush1.bf16.msra.mxu0 %v417
    %566 = vmatprep.subr.bf16.mxu0 0
    %567 = vmatpush1.bf16.msra.mxu0 %v416
    %568 = vmatprep.subr.bf16.mxu0 0
    %569 = vmatpush2.bf16.msra.mxu0 %v431
    %570 = vmatprep.subr.bf16.mxu0 0
    %571 = vmatpush2.bf16.msra.mxu0 %v430
    %572 = vmatprep.subr.bf16.mxu0 0
    %573 = vmatpush2.bf16.msra.mxu0 %v429
    %574 = vmatprep.subr.bf16.mxu0 0
    %575 = vmatpush2.bf16.msra.mxu0 %v428
    %576 = vmatprep.subr.bf16.mxu0 0
    %577 = vmatpush2.bf16.msra.mxu0 %v427
    %578 = vmatprep.subr.bf16.mxu0 0
    %579 = vmatpush2.bf16.msra.mxu0 %v426
    %580 = vmatprep.subr.bf16.mxu0 0
    %581 = vmatpush2.bf16.msra.mxu0 %v425
    %582 = vmatprep.subr.bf16.mxu0 0
    %583 = vmatpush2.bf16.msra.mxu0 %v424
    %584 = vmatprep.mubr.bf16.mxu0 %v165
    %585 = vmatmul.mubr.bf16.gmra.mxu0 %v164
    %v586 = vpop.f32.mrf.mxu0
    %v587 = vadd.f32 %v547, %v586
    %v588 = vpop.f32.mrf.mxu0
    %v589 = vpop.f32.mrf.mxu0
    %v590 = vpop.f32.mrf.mxu0
    %591 = vdwg.mxu0
    %592 = vmatprep.subr.bf16.mxu0 0
    %593 = vmatpush1.bf16.msra.mxu0 %v439
    %594 = vmatprep.subr.bf16.mxu0 0
    %595 = vmatpush1.bf16.msra.mxu0 %v438
    %596 = vmatprep.subr.bf16.mxu0 0
    %597 = vmatpush1.bf16.msra.mxu0 %v437
    %598 = vmatprep.subr.bf16.mxu0 0
    %599 = vmatpush1.bf16.msra.mxu0 %v436
    %600 = vmatprep.subr.bf16.mxu0 0
    %601 = vmatpush1.bf16.msra.mxu0 %v435
    %602 = vmatprep.subr.bf16.mxu0 0
    %603 = vmatpush1.bf16.msra.mxu0 %v434
    %604 = vmatprep.subr.bf16.mxu0 0
    %605 = vmatpush1.bf16.msra.mxu0 %v433
    %606 = vmatprep.subr.bf16.mxu0 0
    %607 = vmatpush1.bf16.msra.mxu0 %v432
    %608 = vmatprep.subr.bf16.mxu0 0
    %609 = vmatpush2.bf16.msra.mxu0 %v447
    %610 = vmatprep.subr.bf16.mxu0 0
    %611 = vmatpush2.bf16.msra.mxu0 %v446
    %612 = vmatprep.subr.bf16.mxu0 0
    %613 = vmatpush2.bf16.msra.mxu0 %v445
    %614 = vmatprep.subr.bf16.mxu0 0
    %615 = vmatpush2.bf16.msra.mxu0 %v444
    %616 = vmatprep.subr.bf16.mxu0 0
    %617 = vmatpush2.bf16.msra.mxu0 %v443
    %618 = vmatprep.subr.bf16.mxu0 0
    %619 = vmatpush2.bf16.msra.mxu0 %v442
    %620 = vmatprep.subr.bf16.mxu0 0
    %621 = vmatpush2.bf16.msra.mxu0 %v441
    %622 = vmatprep.subr.bf16.mxu0 0
    %623 = vmatpush2.bf16.msra.mxu0 %v440
    %624 = vmatprep.mubr.bf16.mxu0 %v167
    %625 = vmatmul.mubr.bf16.gmra.mxu0 %v166
    %v626 = vpop.f32.mrf.mxu0
    %v627 = vadd.f32 %v587, %v626
    %v628 = vpop.f32.mrf.mxu0
    %v629 = vpop.f32.mrf.mxu0
    %v630 = vpop.f32.mrf.mxu0
    %631 = vdwg.mxu0
    %632 = vmatprep.subr.bf16.mxu0 0
    %633 = vmatpush1.bf16.msra.mxu0 %v455
    %634 = vmatprep.subr.bf16.mxu0 0
    %635 = vmatpush1.bf16.msra.mxu0 %v454
    %636 = vmatprep.subr.bf16.mxu0 0
    %637 = vmatpush1.bf16.msra.mxu0 %v453
    %638 = vmatprep.subr.bf16.mxu0 0
    %639 = vmatpush1.bf16.msra.mxu0 %v452
    %640 = vmatprep.subr.bf16.mxu0 0
    %641 = vmatpush1.bf16.msra.mxu0 %v451
    %642 = vmatprep.subr.bf16.mxu0 0
    %643 = vmatpush1.bf16.msra.mxu0 %v450
    %644 = vmatprep.subr.bf16.mxu0 0
    %645 = vmatpush1.bf16.msra.mxu0 %v449
    %646 = vmatprep.subr.bf16.mxu0 0
    %647 = vmatpush1.bf16.msra.mxu0 %v448
    %648 = vmatprep.subr.bf16.mxu0 0
    %649 = vmatpush2.bf16.msra.mxu0 0
    %650 = vmatprep.subr.bf16.mxu0 0
    %651 = vmatpush2.bf16.msra.mxu0 0
    %652 = vmatprep.subr.bf16.mxu0 0
    %653 = vmatpush2.bf16.msra.mxu0 0
    %654 = vmatprep.subr.bf16.mxu0 0
    %655 = vmatpush2.bf16.msra.mxu0 0
    %656 = vmatprep.subr.bf16.mxu0 0
    %657 = vmatpush2.bf16.msra.mxu0 0
    %658 = vmatprep.subr.bf16.mxu0 0
    %659 = vmatpush2.bf16.msra.mxu0 0
    %660 = vmatprep.subr.bf16.mxu0 0
    %661 = vmatpush2.bf16.msra.mxu0 0
    %662 = vmatprep.subr.bf16.mxu0 0
    %663 = vmatpush2.bf16.msra.mxu0 0
    %664 = vmatprep.mubr.bf16.mxu0 0
    %665 = vmatmul.mubr.bf16.gmra.mxu0 %v168
    %v666 = vpop.f32.mrf.mxu0
    %v667 = vadd.f32 %v627, %v666
    %v668 = vpop.f32.mrf.mxu0
    %v669 = vpop.f32.mrf.mxu0
    %v670 = vpop.f32.mrf.mxu0
    %671 = vdwg.mxu0
    %v672 = vmax.f32 %v667, 0.0
    %v673 = vpack.c.bf16 %v672, %v672
    %v674 = vld [vmem:[%s3] sm:$0xf]
    %v675 = vld [vmem:[%s3 + $0x4] sm:$0xf]
    %v676 = vld [vmem:[%s3 + $0x8] sm:$0xf]
    %v677 = vld [vmem:[%s3 + $0xc] sm:$0xf]
    %v678 = vld [vmem:[%s3 + $0x10] sm:$0xf]
    %v679 = vld [vmem:[%s3 + $0x14] sm:$0xf]
    %v680 = vld [vmem:[%s3 + $0x18] sm:$0xf]
    %v681 = vld [vmem:[%s3 + $0x1c] sm:$0xf]
    %v682 = vld [vmem:[%s4] sm:$0x1]
    %v684 = vlaneseq
    %v685 = vshrl.u32 %v684, 7
    %v686 = vsub.s32 0, %v685
    %v687 = vrot.slane %v682, %v686
    %v697 = vunpack.c.l.b16 %v674
    %v698 = vunpack.c.l.b16 %v675
    %v699 = vunpack.c.l.b16 %v676
    %v700 = vunpack.c.l.b16 %v677
    %v701 = vunpack.c.l.b16 %v678
    %v702 = vunpack.c.l.b16 %v679
    %v703 = vunpack.c.l.b16 %v680
    %v704 = vunpack.c.l.b16 %v681
    %v705 = vpack.c.b16 %v698, %v697
    %v706 = vpack.c.b16 %v700, %v699
    %v707 = vpack.c.b16 %v702, %v701
    %v708 = vpack.c.b16 %v704, %v703
    %vm713 = vcmask 523264
    %v715 = vsel %vm713, %v673, 0
    %717 = vmatprep.subr.bf16.mxu0 0
    %718 = vmatpush1.bf16.msra.mxu0 0
    %719 = vmatprep.subr.bf16.mxu0 0
    %720 = vmatpush1.bf16.msra.mxu0 0
    %721 = vmatprep.subr.bf16.mxu0 0
    %722 = vmatpush1.bf16.msra.mxu0 0
    %723 = vmatprep.subr.bf16.mxu0 0
    %724 = vmatpush1.bf16.msra.mxu0 0
    %725 = vmatprep.subr.bf16.mxu0 0
    %726 = vmatpush1.bf16.msra.mxu0 %v708
    %727 = vmatprep.subr.bf16.mxu0 0
    %728 = vmatpush1.bf16.msra.mxu0 %v707
    %729 = vmatprep.subr.bf16.mxu0 0
    %730 = vmatpush1.bf16.msra.mxu0 %v706
    %731 = vmatprep.subr.bf16.mxu0 0
    %732 = vmatpush1.bf16.msra.mxu0 %v705
    %733 = vmatprep.subr.bf16.mxu0 0
    %734 = vmatpush2.bf16.msra.mxu0 0
    %735 = vmatprep.subr.bf16.mxu0 0
    %736 = vmatpush2.bf16.msra.mxu0 0
    %737 = vmatprep.subr.bf16.mxu0 0
    %738 = vmatpush2.bf16.msra.mxu0 0
    %739 = vmatprep.subr.bf16.mxu0 0
    %740 = vmatpush2.bf16.msra.mxu0 0
    %741 = vmatprep.subr.bf16.mxu0 0
    %742 = vmatpush2.bf16.msra.mxu0 0
    %743 = vmatprep.subr.bf16.mxu0 0
    %744 = vmatpush2.bf16.msra.mxu0 0
    %745 = vmatprep.subr.bf16.mxu0 0
    %746 = vmatpush2.bf16.msra.mxu0 0
    %747 = vmatprep.subr.bf16.mxu0 0
    %748 = vmatpush2.bf16.msra.mxu0 0
    %749 = vmatprep.mubr.bf16.mxu0 0
    %750 = vmatmul.mubr.bf16.gmra.mxu0 %v715
    %v751 = vpop.f32.mrf.mxu0
    %v752 = vadd.f32 %v687, %v751
    %v753 = vpop.f32.mrf.mxu0
    %v754 = vpop.f32.mrf.mxu0
    %v755 = vpop.f32.mrf.mxu0
    %756 = vdwg.mxu0
    %v757 = vpack.c.bf16 %v752, %v752
    %v758 = vld [vmem:[%s5] sm:$0xf]
    %v759 = vld [vmem:[%s5 + $0x4] sm:$0xf]
    %v760 = vld [vmem:[%s5 + $0x8] sm:$0xf]
    %v761 = vld [vmem:[%s5 + $0xc] sm:$0xf]
    %v762 = vld [vmem:[%s6] sm:$0x1]
    %v764 = vlaneseq
    %v765 = vshrl.u32 %v764, 7
    %v766 = vsub.s32 0, %v765
    %v767 = vrot.slane %v762, %v766
    %v773 = vunpack.c.l.b16 %v758
    %v774 = vunpack.c.l.b16 %v759
    %v775 = vunpack.c.l.b16 %v760
    %v776 = vunpack.c.l.b16 %v761
    %v777 = vpack.c.b16 %v774, %v773
    %v778 = vpack.c.b16 %v776, %v775
    %vm781 = vcmask 261120
    %v783 = vsel %vm781, %v757, 0
    %785 = vmatprep.subr.bf16.mxu0 0
    %786 = vmatpush1.bf16.msra.mxu0 0
    %787 = vmatprep.subr.bf16.mxu0 0
    %788 = vmatpush1.bf16.msra.mxu0 0
    %789 = vmatprep.subr.bf16.mxu0 0
    %790 = vmatpush1.bf16.msra.mxu0 0
    %791 = vmatprep.subr.bf16.mxu0 0
    %792 = vmatpush1.bf16.msra.mxu0 0
    %793 = vmatprep.subr.bf16.mxu0 0
    %794 = vmatpush1.bf16.msra.mxu0 0
    %795 = vmatprep.subr.bf16.mxu0 0
    %796 = vmatpush1.bf16.msra.mxu0 0
    %797 = vmatprep.subr.bf16.mxu0 0
    %798 = vmatpush1.bf16.msra.mxu0 %v778
    %799 = vmatprep.subr.bf16.mxu0 0
    %800 = vmatpush1.bf16.msra.mxu0 %v777
    %801 = vmatprep.subr.bf16.mxu0 0
    %802 = vmatpush2.bf16.msra.mxu0 0
    %803 = vmatprep.subr.bf16.mxu0 0
    %804 = vmatpush2.bf16.msra.mxu0 0
    %805 = vmatprep.subr.bf16.mxu0 0
    %806 = vmatpush2.bf16.msra.mxu0 0
    %807 = vmatprep.subr.bf16.mxu0 0
    %808 = vmatpush2.bf16.msra.mxu0 0
    %809 = vmatprep.subr.bf16.mxu0 0
    %810 = vmatpush2.bf16.msra.mxu0 0
    %811 = vmatprep.subr.bf16.mxu0 0
    %812 = vmatpush2.bf16.msra.mxu0 0
    %813 = vmatprep.subr.bf16.mxu0 0
    %814 = vmatpush2.bf16.msra.mxu0 0
    %815 = vmatprep.subr.bf16.mxu0 0
    %816 = vmatpush2.bf16.msra.mxu0 0
    %817 = vmatprep.mubr.bf16.mxu0 0
    %818 = vmatmul.mubr.bf16.gmra.mxu0 %v783
    %v819 = vpop.f32.mrf.mxu0
    %v820 = vadd.f32 %v767, %v819
    %v821 = vpop.f32.mrf.mxu0
    %v822 = vpop.f32.mrf.mxu0
    %v823 = vpop.f32.mrf.mxu0
    %824 = vdwg.mxu0
    %v825 = vxor.u32 %v820, 2147483648
    %v826 = vmul.f32 %v825, 1.442695
    %v827 = vpow.pop %v826
    %v828 = vadd.f32 %v827, 1.0
    %v829 = vrcp.pop %v828
    %v830 = vmul.f32 1.0, %v829
    %831 = vst [vmem:[#allocation2] sm:$0xff] %v830
    // Predicated region
    $region30: #{tpu_custom_call.1} parent=1 // pred_check
      _
    $region31: #{tpu_custom_call.1} parent=1 // pred_check_branch
      %833 = sbr.rel (0) target = $region33
    $region32: #{tpu_custom_call.1} parent=1 // pred_region
      %s835 = ssub.s32 128, 128
      %836 = vsyncadd [#allocation3], %s835
      %s838 = sshll.u32 [#allocation2], 4
      %s839 = int_to_ptr.vmem [resolvable:$true] %s838
      %841 = dma.vmem_to_hbm [thread:$0]  %s839, 128, %s7, [#allocation3]
    $region33: #{tpu_custom_call.1} parent=1 // pred_fallthru
      _
    // Predicated region
    $region34: #{tpu_custom_call.1} parent=1 // pred_check
      _
    $region35: #{tpu_custom_call.1} parent=1 // pred_check_branch
      %843 = sbr.rel (0) target = $region37
    $region36: #{tpu_custom_call.1} parent=1 // pred_region
      %844 = dma.done [#allocation3], 128
    $region37: #{tpu_custom_call.1} parent=1 // pred_fallthru
      _
    %845 = vsyncpa [#allocation3], 1

</llo_original>
